<compile_context>
chip_gen: v5e
topology: v5e:2x2
jax: 0.10.0
libtpu: 0.0.40
codegen_flags: <defaults>
</compile_context>

<pallas_src>
import jax
import jax.numpy as jnp
from jax.experimental import pallas as pl
from jax.experimental.pallas import tpu as pltpu

INPUT_SIZE = 273
LAYER_1_SIZE = 256
LATENT_SIZE = 64
LAYER_2_SIZE = 64
OUTPUT_SIZE = 273
DROPOUT_RATE = 0.5

PAD_IN = 384                    # 273 rounded up to a multiple of 128
PAD_OUT = 384
MULV_SIZE = 2 * LATENT_SIZE     # fused mu || log_var head width (=128, lane dense)
MAX_TB = 256                    # batch rows per grid step


def _round_up(n, m):
    return (n + m - 1) // m * m


# ---------------------------------------------------------------------------
# kernel
# ---------------------------------------------------------------------------
def _vae_kernel(x_ref, w1_ref, b1_ref, wmlv_ref, bmlv_ref,
                w3_ref, b3_ref, w4_ref, b4_ref,
                mask_ref, eps_ref,
                recon_ref, mulv_ref):
    x = x_ref[...]
    # encode: h1 = dropout(relu(fc1(x)))
    h1 = jnp.dot(x, w1_ref[...], preferred_element_type=jnp.float32) + b1_ref[...]
    h1 = jnp.maximum(h1, 0.0)
    h1 = h1 * mask_ref[...]                         # inverted-dropout mask

    # fused fc21/fc22 -> one 128-lane-wide matmul
    mulv = jnp.dot(h1, wmlv_ref[...], preferred_element_type=jnp.float32) + bmlv_ref[...]
    mu = mulv[:, :LATENT_SIZE]
    log_var = mulv[:, LATENT_SIZE:]

    # reparameterize: z = mu + eps * exp(0.5 * log_var)
    z = mu + eps_ref[...] * jnp.exp(0.5 * log_var)

    # decode: sigmoid(fc4(relu(fc3(z))))
    h3 = jnp.dot(z, w3_ref[...], preferred_element_type=jnp.float32) + b3_ref[...]
    h3 = jnp.maximum(h3, 0.0)
    logits = jnp.dot(h3, w4_ref[...], preferred_element_type=jnp.float32) + b4_ref[...]

    recon_ref[...] = jax.nn.sigmoid(logits)
    mulv_ref[...] = mulv


# ---------------------------------------------------------------------------
# wrapper
# ---------------------------------------------------------------------------
def _grid_spec(tb, n_tiles):
    tile = lambda i: (i, 0)      # batch-tiled operands
    const = lambda i: (0, 0)     # weights / biases: VMEM resident
    in_specs = [
        pl.BlockSpec((tb, PAD_IN), tile),                  # x (padded)
        pl.BlockSpec((PAD_IN, LAYER_1_SIZE), const),       # w1 (padded rows)
        pl.BlockSpec((1, LAYER_1_SIZE), const),            # b1
        pl.BlockSpec((LAYER_1_SIZE, MULV_SIZE), const),    # w21 || w22
        pl.BlockSpec((1, MULV_SIZE), const),               # b21 || b22
        pl.BlockSpec((LATENT_SIZE, LAYER_2_SIZE), const),  # w3
        pl.BlockSpec((1, LAYER_2_SIZE), const),            # b3
        pl.BlockSpec((LAYER_2_SIZE, PAD_OUT), const),      # w4 (padded cols)
        pl.BlockSpec((1, PAD_OUT), const),                 # b4 (padded)
        pl.BlockSpec((tb, LAYER_1_SIZE), tile),            # dropout mask
        pl.BlockSpec((tb, LATENT_SIZE), tile),             # eps
    ]
    out_specs = (
        pl.BlockSpec((tb, PAD_OUT), tile),                 # recon (lane dense)
        pl.BlockSpec((tb, MULV_SIZE), tile),               # mu || log_var
    )
    return pltpu.PrefetchScalarGridSpec(
        num_scalar_prefetch=0,
        grid=(n_tiles,),
        in_specs=in_specs,
        out_specs=out_specs,
    )


def pack_params(params):
    """One-time: fuse fc21/fc22 and lane-pad fc1/fc4 (273 -> 384)."""
    w1 = jnp.pad(params["w1"], ((0, PAD_IN - INPUT_SIZE), (0, 0)))
    b1 = params["b1"]
    wmlv = jnp.concatenate([params["w21"], params["w22"]], axis=1)
    bmlv = jnp.concatenate([params["b21"], params["b22"]], axis=1)
    w3 = params["w3"]
    b3 = params["b3"]
    w4 = jnp.pad(params["w4"], ((0, 0), (0, PAD_OUT - OUTPUT_SIZE)))
    b4 = jnp.pad(params["b4"], ((0, 0), (0, PAD_OUT - OUTPUT_SIZE)))
    return (w1, b1, wmlv, bmlv, w3, b3, w4, b4)


def _forward(x, packed, mask, eps):
    B = x.shape[0]
    tb = min(MAX_TB, _round_up(max(B, 8), 8))
    bp = _round_up(B, tb)
    n_tiles = bp // tb

    xp = jnp.pad(x, ((0, bp - B), (0, PAD_IN - INPUT_SIZE)))
    mask_p = jnp.pad(mask, ((0, bp - B), (0, 0)))
    eps_p = jnp.pad(eps, ((0, bp - B), (0, 0)))

    recon_p, mulv = pl.pallas_call(
        _vae_kernel,
        out_shape=(
            jax.ShapeDtypeStruct((bp, PAD_OUT), jnp.float32),
            jax.ShapeDtypeStruct((bp, MULV_SIZE), jnp.float32),
        ),
        grid_spec=_grid_spec(tb, n_tiles),
        compiler_params=pltpu.CompilerParams(
            dimension_semantics=("parallel",)),
    )(xp, *packed, mask_p, eps_p)

    recon = recon_p[:B, :OUTPUT_SIZE]
    mu = mulv[:B, :LATENT_SIZE]
    log_var = mulv[:B, LATENT_SIZE:]
    return recon, mu, log_var


@jax.jit
def ngs_vae_forward(x, packed_params, dropout_mask, eps):
    """Forward with externally supplied dropout mask / eps (exact-check path)."""
    return _forward(x, packed_params, dropout_mask, eps)


@jax.jit
def ngs_vae_forward_rng(x, packed_params, key):
    """Production forward: dropout + reparameterization noise drawn from `key`
    in the jitted wrapper (device-side), then consumed by the kernel."""
    B = x.shape[0]
    k_mask, k_eps = jax.random.split(key)
    keep = jax.random.bernoulli(k_mask, 1.0 - DROPOUT_RATE, (B, LAYER_1_SIZE))
    mask = keep.astype(jnp.float32) / (1.0 - DROPOUT_RATE)
    eps = jax.random.normal(k_eps, (B, LATENT_SIZE), jnp.float32)
    return _forward(x, packed_params, mask, eps)


# ---------------------------------------------------------------------------
# init + pure-JAX reference
# ---------------------------------------------------------------------------
def init_params(key):
    """nn.Linear-style init: U(-1/sqrt(fan_in), 1/sqrt(fan_in)); weights (in, out)."""
    def linear(k, fan_in, fan_out):
        kw, kb = jax.random.split(k)
        bound = 1.0 / jnp.sqrt(fan_in)
        w = jax.random.uniform(kw, (fan_in, fan_out), jnp.float32, -bound, bound)
        b = jax.random.uniform(kb, (1, fan_out), jnp.float32, -bound, bound)
        return w, b

    k1, k21, k22, k3, k4 = jax.random.split(key, 5)
    w1, b1 = linear(k1, INPUT_SIZE, LAYER_1_SIZE)
    w21, b21 = linear(k21, LAYER_1_SIZE, LATENT_SIZE)
    w22, b22 = linear(k22, LAYER_1_SIZE, LATENT_SIZE)
    w3, b3 = linear(k3, LATENT_SIZE, LAYER_2_SIZE)
    w4, b4 = linear(k4, LAYER_2_SIZE, OUTPUT_SIZE)
    return dict(w1=w1, b1=b1, w21=w21, b21=b21, w22=w22, b22=b22,
                w3=w3, b3=b3, w4=w4, b4=b4)


def reference_forward(x, params, dropout_mask, eps):
    h1 = jnp.maximum(x @ params["w1"] + params["b1"], 0.0) * dropout_mask
    mu = h1 @ params["w21"] + params["b21"]
    logvar = h1 @ params["w22"] + params["b22"]
    z = mu + eps * jnp.exp(0.5 * logvar)
    h3 = jnp.maximum(z @ params["w3"] + params["b3"], 0.0)
    recon = jax.nn.sigmoid(h3 @ params["w4"] + params["b4"])
    return recon, mu, logvar


if __name__ == "__main__":
    key = jax.random.PRNGKey(0)
    k_param, k_x, k_mask, k_eps, k_rng = jax.random.split(key, 5)

    B = 8
    x = jax.random.uniform(k_x, (B, INPUT_SIZE), jnp.float32)
    params = init_params(k_param)
    packed = pack_params(params)

    # --- path 1: external noise -> exact check against pure-JAX reference ---
    keep = jax.random.bernoulli(k_mask, 1.0 - DROPOUT_RATE, (B, LAYER_1_SIZE))
    dropout_mask = keep.astype(jnp.float32) / (1.0 - DROPOUT_RATE)
    eps = jax.random.normal(k_eps, (B, LATENT_SIZE), jnp.float32)

    recon, mu, logvar = ngs_vae_forward(x, packed, dropout_mask, eps)
    jax.block_until_ready((recon, mu, logvar))

    r_ref, mu_ref, lv_ref = reference_forward(x, params, dropout_mask, eps)
    assert recon.shape == (B, OUTPUT_SIZE)
    assert mu.shape == (B, LATENT_SIZE)
    assert logvar.shape == (B, LATENT_SIZE)
    assert jnp.allclose(recon, r_ref, atol=1e-5), "recon mismatch"
    assert jnp.allclose(mu, mu_ref, atol=1e-5), "mu mismatch"
    assert jnp.allclose(logvar, lv_ref, atol=1e-5), "log_var mismatch"

    # --- path 2: key-driven noise (production path) -> sanity + determinism ---
    r1, m1, lv1 = ngs_vae_forward_rng(x, packed, k_rng)
    r2, m2, lv2 = ngs_vae_forward_rng(x, packed, k_rng)
    jax.block_until_ready((r1, m1, lv1, r2, m2, lv2))
    assert r1.shape == (B, OUTPUT_SIZE) and m1.shape == (B, LATENT_SIZE)
    assert bool(jnp.all(jnp.isfinite(r1))) and bool(jnp.all(jnp.isfinite(m1)))
    assert bool(jnp.all((r1 >= 0.0) & (r1 <= 1.0))), "recon out of sigmoid range"
    assert jnp.array_equal(r1, r2) and jnp.array_equal(m1, m2), \
        "key-driven forward not deterministic for a fixed key"

    print("KERNEL_OK")
</pallas_src>

<mosaic_0001>
module attributes {stable_mosaic.version = 11 : i64} {
  func.func @_vae_kernel(%arg0: i32, %arg1: memref<8x384xf32, #tpu.memory_space<vmem>>, %arg2: memref<384x256xf32, #tpu.memory_space<vmem>>, %arg3: memref<1x256xf32, #tpu.memory_space<vmem>>, %arg4: memref<256x128xf32, #tpu.memory_space<vmem>>, %arg5: memref<1x128xf32, #tpu.memory_space<vmem>>, %arg6: memref<64x64xf32, #tpu.memory_space<vmem>>, %arg7: memref<1x64xf32, #tpu.memory_space<vmem>>, %arg8: memref<64x384xf32, #tpu.memory_space<vmem>>, %arg9: memref<1x384xf32, #tpu.memory_space<vmem>>, %arg10: memref<8x256xf32, #tpu.memory_space<vmem>>, %arg11: memref<8x64xf32, #tpu.memory_space<vmem>>, %arg12: memref<8x384xf32, #tpu.memory_space<vmem>>, %arg13: memref<8x128xf32, #tpu.memory_space<vmem>>) attributes {dimension_semantics = [#tpu.dimension_semantics<parallel>], iteration_bounds = array<i64: 1>, scalar_prefetch = 0 : i64, scratch_operands = 0 : i64, tpu.core_type = #tpu.core_type<tc>, window_params = [{transform_indices = @transform_0, window_bounds = array<i64: 8, 384>}, {pipeline_mode = #tpu.pipeline_mode<synchronous>, transform_indices = @transform_1, window_bounds = array<i64: 384, 256>}, {pipeline_mode = #tpu.pipeline_mode<synchronous>, transform_indices = @transform_2, window_bounds = array<i64: 1, 256>}, {pipeline_mode = #tpu.pipeline_mode<synchronous>, transform_indices = @transform_3, window_bounds = array<i64: 256, 128>}, {pipeline_mode = #tpu.pipeline_mode<synchronous>, transform_indices = @transform_4, window_bounds = array<i64: 1, 128>}, {pipeline_mode = #tpu.pipeline_mode<synchronous>, transform_indices = @transform_5, window_bounds = array<i64: 64, 64>}, {pipeline_mode = #tpu.pipeline_mode<synchronous>, transform_indices = @transform_6, window_bounds = array<i64: 1, 64>}, {pipeline_mode = #tpu.pipeline_mode<synchronous>, transform_indices = @transform_7, window_bounds = array<i64: 64, 384>}, {pipeline_mode = #tpu.pipeline_mode<synchronous>, transform_indices = @transform_8, window_bounds = array<i64: 1, 384>}, {transform_indices = @transform_9, window_bounds = array<i64: 8, 256>}, {transform_indices = @transform_10, window_bounds = array<i64: 8, 64>}, {transform_indices = @transform_11, window_bounds = array<i64: 8, 384>}, {transform_indices = @transform_12, window_bounds = array<i64: 8, 128>}]} {
    %c0 = arith.constant 0 : index
    %c0_0 = arith.constant 0 : index
    %0 = vector.load %arg1[%c0, %c0_0] : memref<8x384xf32, #tpu.memory_space<vmem>>, vector<8x384xf32>
    %c0_1 = arith.constant 0 : index
    %c0_2 = arith.constant 0 : index
    %1 = vector.load %arg2[%c0_1, %c0_2] : memref<384x256xf32, #tpu.memory_space<vmem>>, vector<384x256xf32>
    %cst = arith.constant dense<0.000000e+00> : vector<8x256xf32>
    %2 = tpu.matmul %0, %1, %cst {dimension_numbers = #tpu.dot_dimension_numbers<[1], [0], [0], [1], [0, 0, 1, 1], [], []>} : vector<8x384xf32>, vector<384x256xf32>, vector<8x256xf32> -> vector<8x256xf32>
    %c0_3 = arith.constant 0 : index
    %c0_4 = arith.constant 0 : index
    %3 = vector.load %arg3[%c0_3, %c0_4] : memref<1x256xf32, #tpu.memory_space<vmem>>, vector<1x256xf32>
    %4 = vector.broadcast %3 : vector<1x256xf32> to vector<8x256xf32>
    %5 = arith.addf %2, %4 : vector<8x256xf32>
    %cst_5 = arith.constant 0.000000e+00 : f32
    %6 = vector.broadcast %cst_5 : f32 to vector<8x256xf32>
    %7 = arith.maximumf %5, %6 : vector<8x256xf32>
    %c0_6 = arith.constant 0 : index
    %c0_7 = arith.constant 0 : index
    %8 = vector.load %arg10[%c0_6, %c0_7] : memref<8x256xf32, #tpu.memory_space<vmem>>, vector<8x256xf32>
    %9 = arith.mulf %7, %8 : vector<8x256xf32>
    %c0_8 = arith.constant 0 : index
    %c0_9 = arith.constant 0 : index
    %10 = vector.load %arg4[%c0_8, %c0_9] : memref<256x128xf32, #tpu.memory_space<vmem>>, vector<256x128xf32>
    %cst_10 = arith.constant dense<0.000000e+00> : vector<8x128xf32>
    %11 = tpu.matmul %9, %10, %cst_10 {dimension_numbers = #tpu.dot_dimension_numbers<[1], [0], [0], [1], [0, 0, 1, 1], [], []>} : vector<8x256xf32>, vector<256x128xf32>, vector<8x128xf32> -> vector<8x128xf32>
    %c0_11 = arith.constant 0 : index
    %c0_12 = arith.constant 0 : index
    %12 = vector.load %arg5[%c0_11, %c0_12] : memref<1x128xf32, #tpu.memory_space<vmem>>, vector<1x128xf32>
    %13 = vector.broadcast %12 : vector<1x128xf32> to vector<8x128xf32>
    %14 = arith.addf %11, %13 : vector<8x128xf32>
    %15 = vector.extract_strided_slice %14 {offsets = [0, 0], sizes = [8, 64], strides = [1, 1]} : vector<8x128xf32> to vector<8x64xf32>
    %16 = vector.extract_strided_slice %14 {offsets = [0, 64], sizes = [8, 64], strides = [1, 1]} : vector<8x128xf32> to vector<8x64xf32>
    %c0_13 = arith.constant 0 : index
    %c0_14 = arith.constant 0 : index
    %17 = vector.load %arg11[%c0_13, %c0_14] : memref<8x64xf32, #tpu.memory_space<vmem>>, vector<8x64xf32>
    %cst_15 = arith.constant 5.000000e-01 : f32
    %18 = vector.broadcast %cst_15 : f32 to vector<8x64xf32>
    %19 = arith.mulf %18, %16 : vector<8x64xf32>
    %20 = math.exp %19 : vector<8x64xf32>
    %21 = arith.mulf %17, %20 : vector<8x64xf32>
    %22 = arith.addf %15, %21 : vector<8x64xf32>
    %c0_16 = arith.constant 0 : index
    %c0_17 = arith.constant 0 : index
    %23 = vector.load %arg6[%c0_16, %c0_17] : memref<64x64xf32, #tpu.memory_space<vmem>>, vector<64x64xf32>
    %cst_18 = arith.constant dense<0.000000e+00> : vector<8x64xf32>
    %24 = tpu.matmul %22, %23, %cst_18 {dimension_numbers = #tpu.dot_dimension_numbers<[1], [0], [0], [1], [0, 0, 1, 1], [], []>} : vector<8x64xf32>, vector<64x64xf32>, vector<8x64xf32> -> vector<8x64xf32>
    %c0_19 = arith.constant 0 : index
    %c0_20 = arith.constant 0 : index
    %25 = vector.load %arg7[%c0_19, %c0_20] : memref<1x64xf32, #tpu.memory_space<vmem>>, vector<1x64xf32>
    %26 = vector.broadcast %25 : vector<1x64xf32> to vector<8x64xf32>
    %27 = arith.addf %24, %26 : vector<8x64xf32>
    %cst_21 = arith.constant 0.000000e+00 : f32
    %28 = vector.broadcast %cst_21 : f32 to vector<8x64xf32>
    %29 = arith.maximumf %27, %28 : vector<8x64xf32>
    %c0_22 = arith.constant 0 : index
    %c0_23 = arith.constant 0 : index
    %30 = vector.load %arg8[%c0_22, %c0_23] : memref<64x384xf32, #tpu.memory_space<vmem>>, vector<64x384xf32>
    %cst_24 = arith.constant dense<0.000000e+00> : vector<8x384xf32>
    %31 = tpu.matmul %29, %30, %cst_24 {dimension_numbers = #tpu.dot_dimension_numbers<[1], [0], [0], [1], [0, 0, 1, 1], [], []>} : vector<8x64xf32>, vector<64x384xf32>, vector<8x384xf32> -> vector<8x384xf32>
    %c0_25 = arith.constant 0 : index
    %c0_26 = arith.constant 0 : index
    %32 = vector.load %arg9[%c0_25, %c0_26] : memref<1x384xf32, #tpu.memory_space<vmem>>, vector<1x384xf32>
    %33 = vector.broadcast %32 : vector<1x384xf32> to vector<8x384xf32>
    %34 = arith.addf %31, %33 : vector<8x384xf32>
    %35 = arith.negf %34 : vector<8x384xf32>
    %36 = math.exp %35 : vector<8x384xf32>
    %cst_27 = arith.constant 1.000000e+00 : f32
    %37 = vector.broadcast %cst_27 : f32 to vector<8x384xf32>
    %38 = arith.addf %37, %36 : vector<8x384xf32>
    %39 = arith.divf %37, %38 : vector<8x384xf32>
    %c0_28 = arith.constant 0 : index
    %c0_29 = arith.constant 0 : index
    %40 = vector.load %arg12[%c0_28, %c0_29] : memref<8x384xf32, #tpu.memory_space<vmem>>, vector<8x384xf32>
    tpu.vector_store %arg12[%c0_28, %c0_29], %39 {strides = array<i32>} : memref<8x384xf32, #tpu.memory_space<vmem>>, vector<8x384xf32>,
    %c0_30 = arith.constant 0 : index
    %c0_31 = arith.constant 0 : index
    %41 = vector.load %arg13[%c0_30, %c0_31] : memref<8x128xf32, #tpu.memory_space<vmem>>, vector<8x128xf32>
    tpu.vector_store %arg13[%c0_30, %c0_31], %14 {strides = array<i32>} : memref<8x128xf32, #tpu.memory_space<vmem>>, vector<8x128xf32>,
    return
  }
  func.func @transform_0(%arg0: i32) -> (i32, i32) {
    %c0_i32 = arith.constant 0 : i32
    %c0_i32_0 = arith.constant 0 : i32
    return %arg0, %c0_i32 : i32, i32
  }
  func.func @transform_1(%arg0: i32) -> (i32, i32) {
    %c0_i32 = arith.constant 0 : i32
    %c0_i32_0 = arith.constant 0 : i32
    %c0_i32_1 = arith.constant 0 : i32
    return %c0_i32, %c0_i32_0 : i32, i32
  }
  func.func @transform_2(%arg0: i32) -> (i32, i32) {
    %c0_i32 = arith.constant 0 : i32
    %c0_i32_0 = arith.constant 0 : i32
    %c0_i32_1 = arith.constant 0 : i32
    return %c0_i32, %c0_i32_0 : i32, i32
  }
  func.func @transform_3(%arg0: i32) -> (i32, i32) {
    %c0_i32 = arith.constant 0 : i32
    %c0_i32_0 = arith.constant 0 : i32
    %c0_i32_1 = arith.constant 0 : i32
    return %c0_i32, %c0_i32_0 : i32, i32
  }
  func.func @transform_4(%arg0: i32) -> (i32, i32) {
    %c0_i32 = arith.constant 0 : i32
    %c0_i32_0 = arith.constant 0 : i32
    %c0_i32_1 = arith.constant 0 : i32
    return %c0_i32, %c0_i32_0 : i32, i32
  }
  func.func @transform_5(%arg0: i32) -> (i32, i32) {
    %c0_i32 = arith.constant 0 : i32
    %c0_i32_0 = arith.constant 0 : i32
    %c0_i32_1 = arith.constant 0 : i32
    return %c0_i32, %c0_i32_0 : i32, i32
  }
  func.func @transform_6(%arg0: i32) -> (i32, i32) {
    %c0_i32 = arith.constant 0 : i32
    %c0_i32_0 = arith.constant 0 : i32
    %c0_i32_1 = arith.constant 0 : i32
    return %c0_i32, %c0_i32_0 : i32, i32
  }
  func.func @transform_7(%arg0: i32) -> (i32, i32) {
    %c0_i32 = arith.constant 0 : i32
    %c0_i32_0 = arith.constant 0 : i32
    %c0_i32_1 = arith.constant 0 : i32
    return %c0_i32, %c0_i32_0 : i32, i32
  }
  func.func @transform_8(%arg0: i32) -> (i32, i32) {
    %c0_i32 = arith.constant 0 : i32
    %c0_i32_0 = arith.constant 0 : i32
    %c0_i32_1 = arith.constant 0 : i32
    return %c0_i32, %c0_i32_0 : i32, i32
  }
  func.func @transform_9(%arg0: i32) -> (i32, i32) {
    %c0_i32 = arith.constant 0 : i32
    %c0_i32_0 = arith.constant 0 : i32
    return %arg0, %c0_i32 : i32, i32
  }
  func.func @transform_10(%arg0: i32) -> (i32, i32) {
    %c0_i32 = arith.constant 0 : i32
    %c0_i32_0 = arith.constant 0 : i32
    return %arg0, %c0_i32 : i32, i32
  }
  func.func @transform_11(%arg0: i32) -> (i32, i32) {
    %c0_i32 = arith.constant 0 : i32
    %c0_i32_0 = arith.constant 0 : i32
    return %arg0, %c0_i32 : i32, i32
  }
  func.func @transform_12(%arg0: i32) -> (i32, i32) {
    %c0_i32 = arith.constant 0 : i32
    %c0_i32_0 = arith.constant 0 : i32
    return %arg0, %c0_i32 : i32, i32
  }
}

</mosaic_0001>

<llo_original>
// kernel: ngs_vae_forward.1
$region0: #{ngs_vae_forward.1}
  #allocation0 [shape = 'u32[]', space=smem, size = 0x4, offset = 0x4, fixed_abs, tag = 'smem constant byte address 0x4 - core index']
  #allocation1 [shape = 'u32[72,128]{1,0:T(1,128)}', space=vmem, size = 0x9000, scoped, tag = 'internal scratch']
  %s0 = inlined_call_operand.vmem [shape: f32[8,384], index: 0, kind: input, shape index: {}]
  %s1 = inlined_call_operand.hbm [shape: f32[384,256], index: 1, kind: input, shape index: {}]
  %s2 = inlined_call_operand.vmem [shape: f32[1,256], index: 2, kind: input, shape index: {}]
  %s3 = inlined_call_operand.hbm [shape: f32[256,128], index: 3, kind: input, shape index: {}]
  %s4 = inlined_call_operand.vmem [shape: f32[1,128], index: 4, kind: input, shape index: {}]
  %s5 = inlined_call_operand.hbm [shape: f32[64,64], index: 5, kind: input, shape index: {}]
  %s6 = inlined_call_operand.vmem [shape: f32[1,64], index: 6, kind: input, shape index: {}]
  %s7 = inlined_call_operand.hbm [shape: f32[64,384], index: 7, kind: input, shape index: {}]
  %s8 = inlined_call_operand.vmem [shape: f32[1,384], index: 8, kind: input, shape index: {}]
  %s9 = inlined_call_operand.vmem [shape: f32[8,256], index: 9, kind: input, shape index: {}]
  %s10 = inlined_call_operand.vmem [shape: f32[8,64], index: 10, kind: input, shape index: {}]
  %s11 = inlined_call_operand.hbm [shape: f32[8,384], index: 11, kind: output, shape index: {0}]
  %s12 = inlined_call_operand.vmem [shape: f32[8,128], index: 12, kind: output, shape index: {1}]
  %13 = xla_tuple %s11, %s12
  %s14 = sld [smem:[#allocation0]]
  $region78: #{ngs_vae_forward.1} parent=0
    _
  %s16 = ssub.s32 1, %s14
  %s17 = scalar_select 0, %s16, %s14
  $region1: #{ngs_vae_forward.1} parent=0
    #allocation2 [shape = 'u8[393216]{0}', space=vmem, size = 0x60000, scoped, tag = 'input window, operand 1, single buffered']
    #allocation3 [shape = 's32[1]{0}', space=sflag, size = 0x4, scoped, tag = 'scoped memory for ngs_vae_forward.1']
    #allocation4 [shape = 's32[1]{0}', space=sflag, size = 0x4, scoped, tag = 'scoped memory for ngs_vae_forward.1']
    #allocation5 [shape = 'u8[131072]{0}', space=vmem, size = 0x20000, scoped, tag = 'input window, operand 3, single buffered']
    #allocation6 [shape = 's32[1]{0}', space=sflag, size = 0x4, scoped, tag = 'scoped memory for ngs_vae_forward.1']
    #allocation7 [shape = 'u8[32768]{0}', space=vmem, size = 0x8000, scoped, tag = 'input window, operand 5, single buffered']
    #allocation8 [shape = 'u8[98304]{0}', space=vmem, size = 0x18000, scoped, tag = 'input window, operand 7, single buffered']
    #allocation9 [shape = 's32[1]{0}', space=sflag, size = 0x4, scoped, tag = 'scoped memory for ngs_vae_forward.1']
    #allocation10 [shape = 'u8[12288]{0}', space=vmem, size = 0x3000, scoped, tag = 'output window, operand 0, single buffered']
    %18 = vsyncpa [#allocation3], 0
    %19 = vsyncpa [#allocation6], 0
    %20 = vsyncpa [#allocation9], 0
    %21 = vsyncpa [#allocation4], 0
    // Predicated region
    $region2: #{ngs_vae_forward.1} parent=1 // pred_check
      _
    $region3: #{ngs_vae_forward.1} parent=1 // pred_check_branch
      %23 = sbr.rel (0) target = $region5
    $region4: #{ngs_vae_forward.1} parent=1 // pred_region
      _
    $region5: #{ngs_vae_forward.1} parent=1 // pred_fallthru
      _
    // Predicated region
    $region6: #{ngs_vae_forward.1} parent=1 // pred_check
      _
    $region7: #{ngs_vae_forward.1} parent=1 // pred_check_branch
      %25 = sbr.rel (0) target = $region9
    $region8: #{ngs_vae_forward.1} parent=1 // pred_region
      %27 = vsyncadd [#allocation3], 0
      %s28 = sshll.u32 %s1, 4
      %s29 = int_to_ptr.hbm [resolvable:$true] %s28
      %s30 = sshll.u32 [#allocation2], 4
      %s31 = int_to_ptr.vmem [resolvable:$true] %s30
      %36 = dma.hbm_to_vmem [thread:$0]  %s29, 12288, %s31, [#allocation3], 256, 256, 16
    $region9: #{ngs_vae_forward.1} parent=1 // pred_fallthru
      _
    // Predicated region
    $region10: #{ngs_vae_forward.1} parent=1 // pred_check
      _
    $region11: #{ngs_vae_forward.1} parent=1 // pred_check_branch
      %38 = sbr.rel (0) target = $region13
    $region12: #{ngs_vae_forward.1} parent=1 // pred_region
      _
    $region13: #{ngs_vae_forward.1} parent=1 // pred_fallthru
      _
    // Predicated region
    $region14: #{ngs_vae_forward.1} parent=1 // pred_check
      _
    $region15: #{ngs_vae_forward.1} parent=1 // pred_check_branch
      %40 = sbr.rel (0) target = $region17
    $region16: #{ngs_vae_forward.1} parent=1 // pred_region
      %42 = vsyncadd [#allocation6], 0
      %s43 = sshll.u32 %s3, 4
      %s44 = int_to_ptr.hbm [resolvable:$true] %s43
      %s45 = sshll.u32 [#allocation5], 4
      %s46 = int_to_ptr.vmem [resolvable:$true] %s45
      %51 = dma.hbm_to_vmem [thread:$0]  %s44, 4096, %s46, [#allocation6], 128, 128, 8
    $region17: #{ngs_vae_forward.1} parent=1 // pred_fallthru
      _
    // Predicated region
    $region18: #{ngs_vae_forward.1} parent=1 // pred_check
      _
    $region19: #{ngs_vae_forward.1} parent=1 // pred_check_branch
      %53 = sbr.rel (0) target = $region21
    $region20: #{ngs_vae_forward.1} parent=1 // pred_region
      _
    $region21: #{ngs_vae_forward.1} parent=1 // pred_fallthru
      _
    // Predicated region
    $region22: #{ngs_vae_forward.1} parent=1 // pred_check
      _
    $region23: #{ngs_vae_forward.1} parent=1 // pred_check_branch
      %55 = sbr.rel (0) target = $region25
    $region24: #{ngs_vae_forward.1} parent=1 // pred_region
      %57 = vsyncadd [#allocation6], 0
      %s58 = sshll.u32 %s5, 4
      %s59 = int_to_ptr.hbm [resolvable:$true] %s58
      %s60 = sshll.u32 [#allocation7], 4
      %s61 = int_to_ptr.vmem [resolvable:$true] %s60
      %66 = dma.hbm_to_vmem [thread:$0]  %s59, 1024, %s61, [#allocation6], 128, 128, 8
    $region25: #{ngs_vae_forward.1} parent=1 // pred_fallthru
      _
    // Predicated region
    $region26: #{ngs_vae_forward.1} parent=1 // pred_check
      _
    $region27: #{ngs_vae_forward.1} parent=1 // pred_check_branch
      %68 = sbr.rel (0) target = $region29
    $region28: #{ngs_vae_forward.1} parent=1 // pred_region
      _
    $region29: #{ngs_vae_forward.1} parent=1 // pred_fallthru
      _
    // Predicated region
    $region30: #{ngs_vae_forward.1} parent=1 // pred_check
      _
    $region31: #{ngs_vae_forward.1} parent=1 // pred_check_branch
      %70 = sbr.rel (0) target = $region33
    $region32: #{ngs_vae_forward.1} parent=1 // pred_region
      %72 = vsyncadd [#allocation9], 0
      %s73 = sshll.u32 %s7, 4
      %s74 = int_to_ptr.hbm [resolvable:$true] %s73
      %s75 = sshll.u32 [#allocation8], 4
      %s76 = int_to_ptr.vmem [resolvable:$true] %s75
      %81 = dma.hbm_to_vmem [thread:$0]  %s74, 3072, %s76, [#allocation9], 384, 384, 24
    $region33: #{ngs_vae_forward.1} parent=1 // pred_fallthru
      _
    // Predicated region
    $region34: #{ngs_vae_forward.1} parent=1 // pred_check
      _
    $region35: #{ngs_vae_forward.1} parent=1 // pred_check_branch
      %83 = sbr.rel (0) target = $region37
    $region36: #{ngs_vae_forward.1} parent=1 // pred_region
      _
    $region37: #{ngs_vae_forward.1} parent=1 // pred_fallthru
      _
    // Predicated region
    $region38: #{ngs_vae_forward.1} parent=1 // pred_check
      _
    $region39: #{ngs_vae_forward.1} parent=1 // pred_check_branch
      %85 = sbr.rel (0) target = $region41
    $region40: #{ngs_vae_forward.1} parent=1 // pred_region
      _
    $region41: #{ngs_vae_forward.1} parent=1 // pred_fallthru
      _
    // Predicated region
    $region42: #{ngs_vae_forward.1} parent=1 // pred_check
      _
    $region43: #{ngs_vae_forward.1} parent=1 // pred_check_branch
      %87 = sbr.rel (0) target = $region45
    $region44: #{ngs_vae_forward.1} parent=1 // pred_region
      _
    $region45: #{ngs_vae_forward.1} parent=1 // pred_fallthru
      _
    // Predicated region
    $region46: #{ngs_vae_forward.1} parent=1 // pred_check
      _
    $region47: #{ngs_vae_forward.1} parent=1 // pred_check_branch
      %89 = sbr.rel (0) target = $region49
    $region48: #{ngs_vae_forward.1} parent=1 // pred_region
      %91 = dma.done [#allocation3], 12288
    $region49: #{ngs_vae_forward.1} parent=1 // pred_fallthru
      _
    // Predicated region
    $region50: #{ngs_vae_forward.1} parent=1 // pred_check
      _
    $region51: #{ngs_vae_forward.1} parent=1 // pred_check_branch
      %93 = sbr.rel (0) target = $region53
    $region52: #{ngs_vae_forward.1} parent=1 // pred_region
      %95 = dma.done [#allocation6], 4096
    $region53: #{ngs_vae_forward.1} parent=1 // pred_fallthru
      _
    // Predicated region
    $region54: #{ngs_vae_forward.1} parent=1 // pred_check
      _
    $region55: #{ngs_vae_forward.1} parent=1 // pred_check_branch
      %97 = sbr.rel (0) target = $region57
    $region56: #{ngs_vae_forward.1} parent=1 // pred_region
      %99 = dma.done [#allocation6], 1024
    $region57: #{ngs_vae_forward.1} parent=1 // pred_fallthru
      _
    // Predicated region
    $region58: #{ngs_vae_forward.1} parent=1 // pred_check
      _
    $region59: #{ngs_vae_forward.1} parent=1 // pred_check_branch
      %101 = sbr.rel (0) target = $region61
    $region60: #{ngs_vae_forward.1} parent=1 // pred_region
      %103 = dma.done [#allocation9], 3072
    $region61: #{ngs_vae_forward.1} parent=1 // pred_fallthru
      _
    %v104 = vld [vmem:[%s0] sm:$0xff]
    %v105 = vld [vmem:[%s0 + $0x8] sm:$0xff]
    %v106 = vld [vmem:[%s0 + $0x10] sm:$0xff]
    %v107 = vld [vmem:[#allocation2] sm:$0xff]
    %v108 = vld [vmem:[#allocation2 + $0x8] sm:$0xff]
    %v109 = vld [vmem:[#allocation2 + $0x10] sm:$0xff]
    %v110 = vld [vmem:[#allocation2 + $0x18] sm:$0xff]
    %v111 = vld [vmem:[#allocation2 + $0x20] sm:$0xff]
    %v112 = vld [vmem:[#allocation2 + $0x28] sm:$0xff]
    %v113 = vld [vmem:[#allocation2 + $0x30] sm:$0xff]
    %v114 = vld [vmem:[#allocation2 + $0x38] sm:$0xff]
    %v115 = vld [vmem:[#allocation2 + $0x40] sm:$0xff]
    %v116 = vld [vmem:[#allocation2 + $0x48] sm:$0xff]
    %v117 = vld [vmem:[#allocation2 + $0x50] sm:$0xff]
    %v118 = vld [vmem:[#allocation2 + $0x58] sm:$0xff]
    %v119 = vld [vmem:[#allocation2 + $0x60] sm:$0xff]
    %v120 = vld [vmem:[#allocation2 + $0x68] sm:$0xff]
    %v121 = vld [vmem:[#allocation2 + $0x70] sm:$0xff]
    %v122 = vld [vmem:[#allocation2 + $0x78] sm:$0xff]
    %v123 = vld [vmem:[#allocation2 + $0x80] sm:$0xff]
    %v124 = vld [vmem:[#allocation2 + $0x88] sm:$0xff]
    %v125 = vld [vmem:[#allocation2 + $0x90] sm:$0xff]
    %v126 = vld [vmem:[#allocation2 + $0x98] sm:$0xff]
    %v127 = vld [vmem:[#allocation2 + $0xa0] sm:$0xff]
    %v128 = vld [vmem:[#allocation2 + $0xa8] sm:$0xff]
    %v129 = vld [vmem:[#allocation2 + $0xb0] sm:$0xff]
    %v130 = vld [vmem:[#allocation2 + $0xb8] sm:$0xff]
    %v131 = vld [vmem:[#allocation2 + $0xc0] sm:$0xff]
    %v132 = vld [vmem:[#allocation2 + $0xc8] sm:$0xff]
    %v133 = vld [vmem:[#allocation2 + $0xd0] sm:$0xff]
    %v134 = vld [vmem:[#allocation2 + $0xd8] sm:$0xff]
    %v135 = vld [vmem:[#allocation2 + $0xe0] sm:$0xff]
    %v136 = vld [vmem:[#allocation2 + $0xe8] sm:$0xff]
    %v137 = vld [vmem:[#allocation2 + $0xf0] sm:$0xff]
    %v138 = vld [vmem:[#allocation2 + $0xf8] sm:$0xff]
    %v139 = vld [vmem:[#allocation2 + $0x100] sm:$0xff]
    %v140 = vld [vmem:[#allocation2 + $0x108] sm:$0xff]
    %v141 = vld [vmem:[#allocation2 + $0x110] sm:$0xff]
    %v142 = vld [vmem:[#allocation2 + $0x118] sm:$0xff]
    %v143 = vld [vmem:[#allocation2 + $0x120] sm:$0xff]
    %v144 = vld [vmem:[#allocation2 + $0x128] sm:$0xff]
    %v145 = vld [vmem:[#allocation2 + $0x130] sm:$0xff]
    %v146 = vld [vmem:[#allocation2 + $0x138] sm:$0xff]
    %v147 = vld [vmem:[#allocation2 + $0x140] sm:$0xff]
    %v148 = vld [vmem:[#allocation2 + $0x148] sm:$0xff]
    %v149 = vld [vmem:[#allocation2 + $0x150] sm:$0xff]
    %v150 = vld [vmem:[#allocation2 + $0x158] sm:$0xff]
    %v151 = vld [vmem:[#allocation2 + $0x160] sm:$0xff]
    %v152 = vld [vmem:[#allocation2 + $0x168] sm:$0xff]
    %v153 = vld [vmem:[#allocation2 + $0x170] sm:$0xff]
    %v154 = vld [vmem:[#allocation2 + $0x178] sm:$0xff]
    %v155 = vld [vmem:[#allocation2 + $0x180] sm:$0xff]
    %v156 = vld [vmem:[#allocation2 + $0x188] sm:$0xff]
    %v157 = vld [vmem:[#allocation2 + $0x190] sm:$0xff]
    %v158 = vld [vmem:[#allocation2 + $0x198] sm:$0xff]
    %v159 = vld [vmem:[#allocation2 + $0x1a0] sm:$0xff]
    %v160 = vld [vmem:[#allocation2 + $0x1a8] sm:$0xff]
    %v161 = vld [vmem:[#allocation2 + $0x1b0] sm:$0xff]
    %v162 = vld [vmem:[#allocation2 + $0x1b8] sm:$0xff]
    %v163 = vld [vmem:[#allocation2 + $0x1c0] sm:$0xff]
    %v164 = vld [vmem:[#allocation2 + $0x1c8] sm:$0xff]
    %v165 = vld [vmem:[#allocation2 + $0x1d0] sm:$0xff]
    %v166 = vld [vmem:[#allocation2 + $0x1d8] sm:$0xff]
    %v167 = vld [vmem:[#allocation2 + $0x1e0] sm:$0xff]
    %v168 = vld [vmem:[#allocation2 + $0x1e8] sm:$0xff]
    %v169 = vld [vmem:[#allocation2 + $0x1f0] sm:$0xff]
    %v170 = vld [vmem:[#allocation2 + $0x1f8] sm:$0xff]
    %v171 = vld [vmem:[#allocation2 + $0x200] sm:$0xff]
    %v172 = vld [vmem:[#allocation2 + $0x208] sm:$0xff]
    %v173 = vld [vmem:[#allocation2 + $0x210] sm:$0xff]
    %v174 = vld [vmem:[#allocation2 + $0x218] sm:$0xff]
    %v175 = vld [vmem:[#allocation2 + $0x220] sm:$0xff]
    %v176 = vld [vmem:[#allocation2 + $0x228] sm:$0xff]
    %v177 = vld [vmem:[#allocation2 + $0x230] sm:$0xff]
    %v178 = vld [vmem:[#allocation2 + $0x238] sm:$0xff]
    %v179 = vld [vmem:[#allocation2 + $0x240] sm:$0xff]
    %v180 = vld [vmem:[#allocation2 + $0x248] sm:$0xff]
    %v181 = vld [vmem:[#allocation2 + $0x250] sm:$0xff]
    %v182 = vld [vmem:[#allocation2 + $0x258] sm:$0xff]
    %v183 = vld [vmem:[#allocation2 + $0x260] sm:$0xff]
    %v184 = vld [vmem:[#allocation2 + $0x268] sm:$0xff]
    %v185 = vld [vmem:[#allocation2 + $0x270] sm:$0xff]
    %v186 = vld [vmem:[#allocation2 + $0x278] sm:$0xff]
    %v187 = vld [vmem:[#allocation2 + $0x280] sm:$0xff]
    %v188 = vld [vmem:[#allocation2 + $0x288] sm:$0xff]
    %v189 = vld [vmem:[#allocation2 + $0x290] sm:$0xff]
    %v190 = vld [vmem:[#allocation2 + $0x298] sm:$0xff]
    %v191 = vld [vmem:[#allocation2 + $0x2a0] sm:$0xff]
    %v192 = vld [vmem:[#allocation2 + $0x2a8] sm:$0xff]
    %v193 = vld [vmem:[#allocation2 + $0x2b0] sm:$0xff]
    %v194 = vld [vmem:[#allocation2 + $0x2b8] sm:$0xff]
    %v195 = vld [vmem:[#allocation2 + $0x2c0] sm:$0xff]
    %v196 = vld [vmem:[#allocation2 + $0x2c8] sm:$0xff]
    %v197 = vld [vmem:[#allocation2 + $0x2d0] sm:$0xff]
    %v198 = vld [vmem:[#allocation2 + $0x2d8] sm:$0xff]
    %v199 = vld [vmem:[#allocation2 + $0x2e0] sm:$0xff]
    %v200 = vld [vmem:[#allocation2 + $0x2e8] sm:$0xff]
    %v201 = vld [vmem:[#allocation2 + $0x2f0] sm:$0xff]
    %v202 = vld [vmem:[#allocation2 + $0x2f8] sm:$0xff]
    %v203 = vld [vmem:[%s2] sm:$0x3]
    %v205 = vperm.slane %v203, 0
    %v206 = vperm.slane %v203, 1
    %209 = vmatpush.msra.mxu0 %v137
    %210 = vmatpush.msra.mxu0 %v135
    %211 = vmatpush.msra.mxu0 %v133
    %212 = vmatpush.msra.mxu0 %v131
    %213 = vmatpush.msra.mxu0 %v129
    %214 = vmatpush.msra.mxu0 %v127
    %215 = vmatpush.msra.mxu0 %v125
    %216 = vmatpush.msra.mxu0 %v123
    %217 = vmatpush.msra.mxu0 %v121
    %218 = vmatpush.msra.mxu0 %v119
    %219 = vmatpush.msra.mxu0 %v117
    %220 = vmatpush.msra.mxu0 %v115
    %221 = vmatpush.msra.mxu0 %v113
    %222 = vmatpush.msra.mxu0 %v111
    %223 = vmatpush.msra.mxu0 %v109
    %224 = vmatpush.msra.mxu0 %v107
    %225 = vmatmul.f32.gmra.mxu0 %v104
    %v226 = vpop.f32.mrf.mxu0
    %v227 = vadd.f32 %v205, %v226
    %228 = vdwg.mxu0
    %229 = vmatpush.msra.mxu0 %v169
    %230 = vmatpush.msra.mxu0 %v167
    %231 = vmatpush.msra.mxu0 %v165
    %232 = vmatpush.msra.mxu0 %v163
    %233 = vmatpush.msra.mxu0 %v161
    %234 = vmatpush.msra.mxu0 %v159
    %235 = vmatpush.msra.mxu0 %v157
    %236 = vmatpush.msra.mxu0 %v155
    %237 = vmatpush.msra.mxu0 %v153
    %238 = vmatpush.msra.mxu0 %v151
    %239 = vmatpush.msra.mxu0 %v149
    %240 = vmatpush.msra.mxu0 %v147
    %241 = vmatpush.msra.mxu0 %v145
    %242 = vmatpush.msra.mxu0 %v143
    %243 = vmatpush.msra.mxu0 %v141
    %244 = vmatpush.msra.mxu0 %v139
    %245 = vmatmul.f32.gmra.mxu0 %v105
    %v246 = vpop.f32.mrf.mxu0
    %v247 = vadd.f32 %v227, %v246
    %248 = vdwg.mxu0
    %249 = vmatpush.msra.mxu0 %v201
    %250 = vmatpush.msra.mxu0 %v199
    %251 = vmatpush.msra.mxu0 %v197
    %252 = vmatpush.msra.mxu0 %v195
    %253 = vmatpush.msra.mxu0 %v193
    %254 = vmatpush.msra.mxu0 %v191
    %255 = vmatpush.msra.mxu0 %v189
    %256 = vmatpush.msra.mxu0 %v187
    %257 = vmatpush.msra.mxu0 %v185
    %258 = vmatpush.msra.mxu0 %v183
    %259 = vmatpush.msra.mxu0 %v181
    %260 = vmatpush.msra.mxu0 %v179
    %261 = vmatpush.msra.mxu0 %v177
    %262 = vmatpush.msra.mxu0 %v175
    %263 = vmatpush.msra.mxu0 %v173
    %264 = vmatpush.msra.mxu0 %v171
    %265 = vmatmul.f32.gmra.mxu0 %v106
    %v266 = vpop.f32.mrf.mxu0
    %v267 = vadd.f32 %v247, %v266
    %268 = vdwg.mxu0
    %269 = vmatpush.msra.mxu0 %v138
    %270 = vmatpush.msra.mxu0 %v136
    %271 = vmatpush.msra.mxu0 %v134
    %272 = vmatpush.msra.mxu0 %v132
    %273 = vmatpush.msra.mxu0 %v130
    %274 = vmatpush.msra.mxu0 %v128
    %275 = vmatpush.msra.mxu0 %v126
    %276 = vmatpush.msra.mxu0 %v124
    %277 = vmatpush.msra.mxu0 %v122
    %278 = vmatpush.msra.mxu0 %v120
    %279 = vmatpush.msra.mxu0 %v118
    %280 = vmatpush.msra.mxu0 %v116
    %281 = vmatpush.msra.mxu0 %v114
    %282 = vmatpush.msra.mxu0 %v112
    %283 = vmatpush.msra.mxu0 %v110
    %284 = vmatpush.msra.mxu0 %v108
    %285 = vmatmul.f32.gmra.mxu0 %v104
    %v286 = vpop.f32.mrf.mxu0
    %v287 = vadd.f32 %v206, %v286
    %288 = vdwg.mxu0
    %289 = vmatpush.msra.mxu0 %v170
    %290 = vmatpush.msra.mxu0 %v168
    %291 = vmatpush.msra.mxu0 %v166
    %292 = vmatpush.msra.mxu0 %v164
    %293 = vmatpush.msra.mxu0 %v162
    %294 = vmatpush.msra.mxu0 %v160
    %295 = vmatpush.msra.mxu0 %v158
    %296 = vmatpush.msra.mxu0 %v156
    %297 = vmatpush.msra.mxu0 %v154
    %298 = vmatpush.msra.mxu0 %v152
    %299 = vmatpush.msra.mxu0 %v150
    %300 = vmatpush.msra.mxu0 %v148
    %301 = vmatpush.msra.mxu0 %v146
    %302 = vmatpush.msra.mxu0 %v144
    %303 = vmatpush.msra.mxu0 %v142
    %304 = vmatpush.msra.mxu0 %v140
    %305 = vmatmul.f32.gmra.mxu0 %v105
    %v306 = vpop.f32.mrf.mxu0
    %v307 = vadd.f32 %v287, %v306
    %308 = vdwg.mxu0
    %309 = vmatpush.msra.mxu0 %v202
    %310 = vmatpush.msra.mxu0 %v200
    %311 = vmatpush.msra.mxu0 %v198
    %312 = vmatpush.msra.mxu0 %v196
    %313 = vmatpush.msra.mxu0 %v194
    %314 = vmatpush.msra.mxu0 %v192
    %315 = vmatpush.msra.mxu0 %v190
    %316 = vmatpush.msra.mxu0 %v188
    %317 = vmatpush.msra.mxu0 %v186
    %318 = vmatpush.msra.mxu0 %v184
    %319 = vmatpush.msra.mxu0 %v182
    %320 = vmatpush.msra.mxu0 %v180
    %321 = vmatpush.msra.mxu0 %v178
    %322 = vmatpush.msra.mxu0 %v176
    %323 = vmatpush.msra.mxu0 %v174
    %324 = vmatpush.msra.mxu0 %v172
    %325 = vmatmul.f32.gmra.mxu0 %v106
    %v326 = vpop.f32.mrf.mxu0
    %v327 = vadd.f32 %v307, %v326
    %328 = vdwg.mxu0
    %v329 = vmax.f32 %v267, 0.0
    %v330 = vmax.f32 %v327, 0.0
    %v331 = vld [vmem:[%s9] sm:$0xff]
    %v332 = vld [vmem:[%s9 + $0x8] sm:$0xff]
    %v333 = vmul.f32 %v329, %v331
    %v334 = vmul.f32 %v330, %v332
    %v335 = vld [vmem:[#allocation5] sm:$0xff]
    %v336 = vld [vmem:[#allocation5 + $0x8] sm:$0xff]
    %v337 = vld [vmem:[#allocation5 + $0x10] sm:$0xff]
    %v338 = vld [vmem:[#allocation5 + $0x18] sm:$0xff]
    %v339 = vld [vmem:[#allocation5 + $0x20] sm:$0xff]
    %v340 = vld [vmem:[#allocation5 + $0x28] sm:$0xff]
    %v341 = vld [vmem:[#allocation5 + $0x30] sm:$0xff]
    %v342 = vld [vmem:[#allocation5 + $0x38] sm:$0xff]
    %v343 = vld [vmem:[#allocation5 + $0x40] sm:$0xff]
    %v344 = vld [vmem:[#allocation5 + $0x48] sm:$0xff]
    %v345 = vld [vmem:[#allocation5 + $0x50] sm:$0xff]
    %v346 = vld [vmem:[#allocation5 + $0x58] sm:$0xff]
    %v347 = vld [vmem:[#allocation5 + $0x60] sm:$0xff]
    %v348 = vld [vmem:[#allocation5 + $0x68] sm:$0xff]
    %v349 = vld [vmem:[#allocation5 + $0x70] sm:$0xff]
    %v350 = vld [vmem:[#allocation5 + $0x78] sm:$0xff]
    %v351 = vld [vmem:[#allocation5 + $0x80] sm:$0xff]
    %v352 = vld [vmem:[#allocation5 + $0x88] sm:$0xff]
    %v353 = vld [vmem:[#allocation5 + $0x90] sm:$0xff]
    %v354 = vld [vmem:[#allocation5 + $0x98] sm:$0xff]
    %v355 = vld [vmem:[#allocation5 + $0xa0] sm:$0xff]
    %v356 = vld [vmem:[#allocation5 + $0xa8] sm:$0xff]
    %v357 = vld [vmem:[#allocation5 + $0xb0] sm:$0xff]
    %v358 = vld [vmem:[#allocation5 + $0xb8] sm:$0xff]
    %v359 = vld [vmem:[#allocation5 + $0xc0] sm:$0xff]
    %v360 = vld [vmem:[#allocation5 + $0xc8] sm:$0xff]
    %v361 = vld [vmem:[#allocation5 + $0xd0] sm:$0xff]
    %v362 = vld [vmem:[#allocation5 + $0xd8] sm:$0xff]
    %v363 = vld [vmem:[#allocation5 + $0xe0] sm:$0xff]
    %v364 = vld [vmem:[#allocation5 + $0xe8] sm:$0xff]
    %v365 = vld [vmem:[#allocation5 + $0xf0] sm:$0xff]
    %v366 = vld [vmem:[#allocation5 + $0xf8] sm:$0xff]
    %v367 = vld [vmem:[%s4] sm:$0x1]
    %v369 = vperm.slane %v367, 0
    %371 = vmatpush.msra.mxu0 %v350
    %372 = vmatpush.msra.mxu0 %v349
    %373 = vmatpush.msra.mxu0 %v348
    %374 = vmatpush.msra.mxu0 %v347
    %375 = vmatpush.msra.mxu0 %v346
    %376 = vmatpush.msra.mxu0 %v345
    %377 = vmatpush.msra.mxu0 %v344
    %378 = vmatpush.msra.mxu0 %v343
    %379 = vmatpush.msra.mxu0 %v342
    %380 = vmatpush.msra.mxu0 %v341
    %381 = vmatpush.msra.mxu0 %v340
    %382 = vmatpush.msra.mxu0 %v339
    %383 = vmatpush.msra.mxu0 %v338
    %384 = vmatpush.msra.mxu0 %v337
    %385 = vmatpush.msra.mxu0 %v336
    %386 = vmatpush.msra.mxu0 %v335
    %387 = vmatmul.f32.gmra.mxu0 %v333
    %v388 = vpop.f32.mrf.mxu0
    %v389 = vadd.f32 %v369, %v388
    %390 = vdwg.mxu0
    %391 = vmatpush.msra.mxu0 %v366
    %392 = vmatpush.msra.mxu0 %v365
    %393 = vmatpush.msra.mxu0 %v364
    %394 = vmatpush.msra.mxu0 %v363
    %395 = vmatpush.msra.mxu0 %v362
    %396 = vmatpush.msra.mxu0 %v361
    %397 = vmatpush.msra.mxu0 %v360
    %398 = vmatpush.msra.mxu0 %v359
    %399 = vmatpush.msra.mxu0 %v358
    %400 = vmatpush.msra.mxu0 %v357
    %401 = vmatpush.msra.mxu0 %v356
    %402 = vmatpush.msra.mxu0 %v355
    %403 = vmatpush.msra.mxu0 %v354
    %404 = vmatpush.msra.mxu0 %v353
    %405 = vmatpush.msra.mxu0 %v352
    %406 = vmatpush.msra.mxu0 %v351
    %407 = vmatmul.f32.gmra.mxu0 %v334
    %v408 = vpop.f32.mrf.mxu0
    %v409 = vadd.f32 %v389, %v408
    %410 = vdwg.mxu0
    %v411 = vld [vmem:[%s10] sm:$0xff]
    %v412 = vmul.f32 %v409, 0.5
    %v413 = vmul.f32 %v412, 1.442695
    %v414 = vpow.pop %v413
    %416 = vrot.lane.b32.xlu0 %v414, 64
    %v417 = vpop.permute.xlu0 %416
    %v419 = vmul.f32 %v411, %v417
    %v420 = vadd.f32 %v409, %v419
    %v421 = vld [vmem:[#allocation7] sm:$0xff]
    %v422 = vld [vmem:[#allocation7 + $0x8] sm:$0xff]
    %v423 = vld [vmem:[#allocation7 + $0x10] sm:$0xff]
    %v424 = vld [vmem:[#allocation7 + $0x18] sm:$0xff]
    %v425 = vld [vmem:[#allocation7 + $0x20] sm:$0xff]
    %v426 = vld [vmem:[#allocation7 + $0x28] sm:$0xff]
    %v427 = vld [vmem:[#allocation7 + $0x30] sm:$0xff]
    %v428 = vld [vmem:[#allocation7 + $0x38] sm:$0xff]
    %v429 = vld [vmem:[%s6] sm:$0x1]
    %v431 = vperm.slane %v429, 0
    %vm433 = vcmask 523264
    %v435 = vsel %vm433, %v420, 0
    %437 = vmatpush.msra.mxu0 0.0
    %438 = vmatpush.msra.mxu0 0.0
    %439 = vmatpush.msra.mxu0 0.0
    %440 = vmatpush.msra.mxu0 0.0
    %441 = vmatpush.msra.mxu0 0.0
    %442 = vmatpush.msra.mxu0 0.0
    %443 = vmatpush.msra.mxu0 0.0
    %444 = vmatpush.msra.mxu0 0.0
    %445 = vmatpush.msra.mxu0 %v428
    %446 = vmatpush.msra.mxu0 %v427
    %447 = vmatpush.msra.mxu0 %v426
    %448 = vmatpush.msra.mxu0 %v425
    %449 = vmatpush.msra.mxu0 %v424
    %450 = vmatpush.msra.mxu0 %v423
    %451 = vmatpush.msra.mxu0 %v422
    %452 = vmatpush.msra.mxu0 %v421
    %453 = vmatmul.f32.gmra.mxu0 %v435
    %v454 = vpop.f32.mrf.mxu0
    %v455 = vadd.f32 %v431, %v454
    %456 = vdwg.mxu0
    %v457 = vmax.f32 %v455, 0.0
    %v458 = vld [vmem:[#allocation8] sm:$0xff]
    %v459 = vld [vmem:[#allocation8 + $0x8] sm:$0xff]
    %v460 = vld [vmem:[#allocation8 + $0x10] sm:$0xff]
    %v461 = vld [vmem:[#allocation8 + $0x18] sm:$0xff]
    %v462 = vld [vmem:[#allocation8 + $0x20] sm:$0xff]
    %v463 = vld [vmem:[#allocation8 + $0x28] sm:$0xff]
    %v464 = vld [vmem:[#allocation8 + $0x30] sm:$0xff]
    %v465 = vld [vmem:[#allocation8 + $0x38] sm:$0xff]
    %v466 = vld [vmem:[#allocation8 + $0x40] sm:$0xff]
    %v467 = vld [vmem:[#allocation8 + $0x48] sm:$0xff]
    %v468 = vld [vmem:[#allocation8 + $0x50] sm:$0xff]
    %v469 = vld [vmem:[#allocation8 + $0x58] sm:$0xff]
    %v470 = vld [vmem:[#allocation8 + $0x60] sm:$0xff]
    %v471 = vld [vmem:[#allocation8 + $0x68] sm:$0xff]
    %v472 = vld [vmem:[#allocation8 + $0x70] sm:$0xff]
    %v473 = vld [vmem:[#allocation8 + $0x78] sm:$0xff]
    %v474 = vld [vmem:[#allocation8 + $0x80] sm:$0xff]
    %v475 = vld [vmem:[#allocation8 + $0x88] sm:$0xff]
    %v476 = vld [vmem:[#allocation8 + $0x90] sm:$0xff]
    %v477 = vld [vmem:[#allocation8 + $0x98] sm:$0xff]
    %v478 = vld [vmem:[#allocation8 + $0xa0] sm:$0xff]
    %v479 = vld [vmem:[#allocation8 + $0xa8] sm:$0xff]
    %v480 = vld [vmem:[#allocation8 + $0xb0] sm:$0xff]
    %v481 = vld [vmem:[#allocation8 + $0xb8] sm:$0xff]
    %v482 = vld [vmem:[%s8] sm:$0x7]
    %v484 = vperm.slane %v482, 0
    %v485 = vperm.slane %v482, 1
    %v486 = vperm.slane %v482, 2
    %v491 = vsel %vm433, %v457, 0
    %493 = vmatpush.msra.mxu0 0.0
    %494 = vmatpush.msra.mxu0 0.0
    %495 = vmatpush.msra.mxu0 0.0
    %496 = vmatpush.msra.mxu0 0.0
    %497 = vmatpush.msra.mxu0 0.0
    %498 = vmatpush.msra.mxu0 0.0
    %499 = vmatpush.msra.mxu0 0.0
    %500 = vmatpush.msra.mxu0 0.0
    %501 = vmatpush.msra.mxu0 %v479
    %502 = vmatpush.msra.mxu0 %v476
    %503 = vmatpush.msra.mxu0 %v473
    %504 = vmatpush.msra.mxu0 %v470
    %505 = vmatpush.msra.mxu0 %v467
    %506 = vmatpush.msra.mxu0 %v464
    %507 = vmatpush.msra.mxu0 %v461
    %508 = vmatpush.msra.mxu0 %v458
    %509 = vmatmul.f32.gmra.mxu0 %v491
    %v510 = vpop.f32.mrf.mxu0
    %v511 = vadd.f32 %v484, %v510
    %512 = vdwg.mxu0
    %513 = vmatpush.msra.mxu0 0.0
    %514 = vmatpush.msra.mxu0 0.0
    %515 = vmatpush.msra.mxu0 0.0
    %516 = vmatpush.msra.mxu0 0.0
    %517 = vmatpush.msra.mxu0 0.0
    %518 = vmatpush.msra.mxu0 0.0
    %519 = vmatpush.msra.mxu0 0.0
    %520 = vmatpush.msra.mxu0 0.0
    %521 = vmatpush.msra.mxu0 %v480
    %522 = vmatpush.msra.mxu0 %v477
    %523 = vmatpush.msra.mxu0 %v474
    %524 = vmatpush.msra.mxu0 %v471
    %525 = vmatpush.msra.mxu0 %v468
    %526 = vmatpush.msra.mxu0 %v465
    %527 = vmatpush.msra.mxu0 %v462
    %528 = vmatpush.msra.mxu0 %v459
    %529 = vmatmul.f32.gmra.mxu0 %v491
    %v530 = vpop.f32.mrf.mxu0
    %v531 = vadd.f32 %v485, %v530
    %532 = vdwg.mxu0
    %533 = vmatpush.msra.mxu0 0.0
    %534 = vmatpush.msra.mxu0 0.0
    %535 = vmatpush.msra.mxu0 0.0
    %536 = vmatpush.msra.mxu0 0.0
    %537 = vmatpush.msra.mxu0 0.0
    %538 = vmatpush.msra.mxu0 0.0
    %539 = vmatpush.msra.mxu0 0.0
    %540 = vmatpush.msra.mxu0 0.0
    %541 = vmatpush.msra.mxu0 %v481
    %542 = vmatpush.msra.mxu0 %v478
    %543 = vmatpush.msra.mxu0 %v475
    %544 = vmatpush.msra.mxu0 %v472
    %545 = vmatpush.msra.mxu0 %v469
    %546 = vmatpush.msra.mxu0 %v466
    %547 = vmatpush.msra.mxu0 %v463
    %548 = vmatpush.msra.mxu0 %v460
    %549 = vmatmul.f32.gmra.mxu0 %v491
    %v550 = vpop.f32.mrf.mxu0
    %v551 = vadd.f32 %v486, %v550
    %552 = vdwg.mxu0
    %v553 = vxor.u32 %v511, 2147483648
    %v554 = vxor.u32 %v531, 2147483648
    %v555 = vxor.u32 %v551, 2147483648
    %v556 = vmul.f32 %v553, 1.442695
    %v557 = vpow.pop %v556
    %v558 = vmul.f32 %v554, 1.442695
    %v559 = vpow.pop %v558
    %v560 = vmul.f32 %v555, 1.442695
    %v561 = vpow.pop %v560
    %v562 = vadd.f32 %v557, 1.0
    %v563 = vadd.f32 %v559, 1.0
    %v564 = vadd.f32 %v561, 1.0
    %v565 = vrcp.pop %v562
    %v566 = vmul.f32 %v562, %v565
    %v567 = vsub.f32 1.0, %v566
    %v568 = vmul.f32 %v565, %v567
    %v569 = vadd.f32 %v565, %v568
    %vm570 = vweird.f32 %v562
    %vm571 = vweird.f32 %v565
    %vm572 = vmor %vm570, %vm571
    %v573 = vsel %vm572, %v565, %v569
    %v574 = vand.u32 2147483647, %v562
    %vm575 = vcmp.eq.f32.partialorder %v574, 8.507059e+37
    %v576 = vand.u32 %v562, 2147483648
    %v577 = vor.u32 1.1754944e-38, %v576
    %v578 = vsel %vm575, %v577, %v573
    %v579 = vmul.f32 1.0, %v578
    %v580 = vrcp.pop %v563
    %v581 = vmul.f32 %v563, %v580
    %v582 = vsub.f32 1.0, %v581
    %v583 = vmul.f32 %v580, %v582
    %v584 = vadd.f32 %v580, %v583
    %vm585 = vweird.f32 %v563
    %vm586 = vweird.f32 %v580
    %vm587 = vmor %vm585, %vm586
    %v588 = vsel %vm587, %v580, %v584
    %v589 = vand.u32 2147483647, %v563
    %vm590 = vcmp.eq.f32.partialorder %v589, 8.507059e+37
    %v591 = vand.u32 %v563, 2147483648
    %v592 = vor.u32 1.1754944e-38, %v591
    %v593 = vsel %vm590, %v592, %v588
    %v594 = vmul.f32 1.0, %v593
    %v595 = vrcp.pop %v564
    %v596 = vmul.f32 %v564, %v595
    %v597 = vsub.f32 1.0, %v596
    %v598 = vmul.f32 %v595, %v597
    %v599 = vadd.f32 %v595, %v598
    %vm600 = vweird.f32 %v564
    %vm601 = vweird.f32 %v595
    %vm602 = vmor %vm600, %vm601
    %v603 = vsel %vm602, %v595, %v599
    %v604 = vand.u32 2147483647, %v564
    %vm605 = vcmp.eq.f32.partialorder %v604, 8.507059e+37
    %v606 = vand.u32 %v564, 2147483648
    %v607 = vor.u32 1.1754944e-38, %v606
    %v608 = vsel %vm605, %v607, %v603
    %v609 = vmul.f32 1.0, %v608
    %610 = vst [vmem:[#allocation10] sm:$0xff] %v579
    %611 = vst [vmem:[#allocation10 + $0x8] sm:$0xff] %v594
    %612 = vst [vmem:[#allocation10 + $0x10] sm:$0xff] %v609
    %613 = vst [vmem:[%s12] sm:$0xff] %v409
    // Predicated region
    $region62: #{ngs_vae_forward.1} parent=1 // pred_check
      _
    $region63: #{ngs_vae_forward.1} parent=1 // pred_check_branch
      %615 = sbr.rel (0) target = $region65
    $region64: #{ngs_vae_forward.1} parent=1 // pred_region
      %617 = vsyncadd [#allocation4], 0
      %s619 = sshll.u32 [#allocation10], 4
      %s620 = int_to_ptr.vmem [resolvable:$true] %s619
      %s621 = sshll.u32 %s11, 4
      %s622 = int_to_ptr.hbm [resolvable:$true] %s621
      %624 = dma.vmem_to_hbm [thread:$0]  %s620, 384, %s622, [#allocation4]
    $region65: #{ngs_vae_forward.1} parent=1 // pred_fallthru
      _
    // Predicated region
    $region66: #{ngs_vae_forward.1} parent=1 // pred_check
      _
    $region67: #{ngs_vae_forward.1} parent=1 // pred_check_branch
      %626 = sbr.rel (0) target = $region69
    $region68: #{ngs_vae_forward.1} parent=1 // pred_region
      _
    $region69: #{ngs_vae_forward.1} parent=1 // pred_fallthru
      _
    // Predicated region
    $region70: #{ngs_vae_forward.1} parent=1 // pred_check
      _
    $region71: #{ngs_vae_forward.1} parent=1 // pred_check_branch
      %628 = sbr.rel (0) target = $region73
    $region72: #{ngs_vae_forward.1} parent=1 // pred_region
      %630 = dma.done [#allocation4], 384
    $region73: #{ngs_vae_forward.1} parent=1 // pred_fallthru
      _
    // Predicated region
    $region74: #{ngs_vae_forward.1} parent=1 // pred_check
      _
    $region75: #{ngs_vae_forward.1} parent=1 // pred_check_branch
      %632 = sbr.rel (0) target = $region77
    $region76: #{ngs_vae_forward.1} parent=1 // pred_region
      _
    $region77: #{ngs_vae_forward.1} parent=1 // pred_fallthru
      _
    %633 = vsyncpa [#allocation3], 1
    %634 = vsyncpa [#allocation6], 1
    %635 = vsyncpa [#allocation9], 1
    %636 = vsyncpa [#allocation4], 1

</llo_original>
